<compile_context>
chip_gen: v5e
topology: v5e:2x2
jax: 0.10.0
libtpu: 0.0.40
codegen_flags: <defaults>
</compile_context>

<pallas_src>
import math
import functools

import jax
import jax.numpy as jnp
from jax import lax
from jax.experimental import pallas as pl
from jax.experimental.pallas import tpu as pltpu


def _round_up(x, m):
    return (x + m - 1) // m * m


def _pad2(a, rows, cols):
    pr, pc = rows - a.shape[0], cols - a.shape[1]
    if pr == 0 and pc == 0:
        return a
    return jnp.pad(a, ((0, pr), (0, pc)))


def _select_config():
    """Per-generation (tm, tn, tk, vmem_limit_bytes, is_v7x)."""
    try:
        kind = jax.devices()[0].device_kind.lower()
    except Exception:
        kind = ""
    if ("v7" in kind) or ("7x" in kind):
        # 64 MiB physical VMEM / TC; these tiles use well under 16 MiB with
        # double-buffering, leaving headroom.  Shape-aware tn shrink below
        # keeps >=2 parallel grid blocks so neither TensorCore idles.
        return 512, 512, 512, 48 * 1024 * 1024, True
    if ("v5" in kind) and (("lite" in kind) or ("5e" in kind)):
        # v5e: HBM-bound on the W stream -> large tm halves W traffic.
        return 1024, 512, 512, 80 * 1024 * 1024, False
    if ("v6" in kind) or ("v5" in kind) or ("v4" in kind):
        # 128 MiB VMEM: deeper K tiles cut grid-step overhead and accumulator
        # round trips; still ~12 MiB total with double buffers.
        return 512, 512, 1024, 64 * 1024 * 1024, False
    # Unknown device: be conservative.
    return 256, 256, 512, 48 * 1024 * 1024, False


def _lora_linear_kernel(x_ref, w_ref, b_ref, d_ref, u_ref, o_ref, acc_ref):
    # x_ref  : [tm, tk]     activations tile
    # w_ref  : [tn, tk]     base weight tile (PyTorch [D_out, D_in] layout)
    # b_ref  : [1,  tn]     base bias tile        (K-resident)
    # d_ref  : [tm, r_pad]  scale * (x @ down^T)  (j/K-resident, precomputed)
    # u_ref  : [tn, r_pad]  LoRA up tile          (K-resident)
    # o_ref  : [tm, tn]     output tile           (K-resident)
    # acc_ref: [tm, tn]     f32 accumulator for x @ W^T
    k = pl.program_id(2)
    nk = pl.num_programs(2)

    @pl.when(k == 0)
    def _():
        acc_ref[...] = jnp.zeros_like(acc_ref)

    nt = (((1,), (1,)), ((), ()))  # contract the last dim of both operands

    # Base-linear partial sum:  x[tm, tk] @ W[tn, tk]^T
    acc_ref[...] += lax.dot_general(x_ref[...], w_ref[...], nt,
                                    preferred_element_type=jnp.float32)

    # Epilogue exactly once, on the last K step.
    @pl.when(k == nk - 1)
    def _():
        # LoRA "up":  d[tm, r_pad] @ up[tn, r_pad]^T  (scale already folded in).
        h = lax.dot_general(d_ref[...], u_ref[...], nt,
                            preferred_element_type=jnp.float32)
        # dropout(h) with drop_prob = 0.0 is the identity; keep the epilogue in
        # f32 and cast only at the store.
        o_ref[...] = (acc_ref[...] + b_ref[...] + h).astype(o_ref.dtype)


def lora_linear_forward(x, w, b, down_w, up_w, scale):
    """forward(x) = x @ w.T + b + scale * (x @ down_w.T) @ up_w.T

    x: [B, S, D_in]; w: [D_out, D_in]; b: [D_out];
    down_w: [r, D_in]; up_w: [D_out, r]  (PyTorch layout, no transposes).
    """
    B, S, D_in = x.shape
    D_out = w.shape[0]
    r = down_w.shape[0]
    M = B * S

    tm_t, tn_t, tk_t, vmem_limit, is_v7x = _select_config()

    # Pad to sublane/lane friendly sizes; output last dim lane-dense (>=128).
    M_p = _round_up(M, 8)
    Din_p = _round_up(D_in, 128)
    Dout_p = _round_up(D_out, 128)
    r_p = _round_up(r, 128)          # lane-dense LoRA rank

    tm = min(tm_t, M_p)
    tn = min(tn_t, Dout_p)
    tk = min(tk_t, Din_p)

    # v7x has 2 TensorCores: keep >= 2 blocks on the parallel grid axes.
    if is_v7x and (M_p // tm) < 2 and (Dout_p // tn) < 2 and Dout_p >= 256:
        tn = max(128, (Dout_p // 2) // 128 * 128)

    M_p = _round_up(M_p, tm)
    Din_p = _round_up(Din_p, tk)
    Dout_p = _round_up(Dout_p, tn)

    x2 = x.reshape(M, D_in)

    # Hoisted LoRA down projection (only M x r work) with scale folded in.
    d = (scale * jnp.dot(x2, down_w.T,
                         preferred_element_type=jnp.float32)).astype(x.dtype)

    x2_p = _pad2(x2, M_p, Din_p)
    w_p = _pad2(w, Dout_p, Din_p)
    b_p = _pad2(b.reshape(1, D_out), 1, Dout_p)
    d_p = _pad2(d, M_p, r_p)
    u_p = _pad2(up_w, Dout_p, r_p)

    grid = (M_p // tm, Dout_p // tn, Din_p // tk)

    itemsize = jnp.dtype(x.dtype).itemsize
    flops = (2 * M_p * Din_p * Dout_p + 2 * M_p * r_p * Dout_p)
    bytes_accessed = itemsize * (
        x2_p.size * (Dout_p // tn)       # x re-streamed per j block
        + w_p.size * (M_p // tm)         # W re-streamed per i block
        + b_p.size + d_p.size + u_p.size + M_p * Dout_p)

    out = pl.pallas_call(
        _lora_linear_kernel,
        out_shape=jax.ShapeDtypeStruct((M_p, Dout_p), x.dtype),
        grid_spec=pltpu.PrefetchScalarGridSpec(
            num_scalar_prefetch=0,
            grid=grid,
            in_specs=[
                pl.BlockSpec((tm, tk), lambda i, j, k: (i, k)),    # x
                pl.BlockSpec((tn, tk), lambda i, j, k: (j, k)),    # W
                pl.BlockSpec((1, tn), lambda i, j, k: (0, j)),     # bias (K-res.)
                pl.BlockSpec((tm, r_p), lambda i, j, k: (i, 0)),   # d (j/K-res.)
                pl.BlockSpec((tn, r_p), lambda i, j, k: (j, 0)),   # up (K-res.)
            ],
            out_specs=pl.BlockSpec((tm, tn), lambda i, j, k: (i, j)),
            scratch_shapes=[
                pltpu.VMEM((tm, tn), jnp.float32),   # base accumulator
            ],
        ),
        compiler_params=pltpu.CompilerParams(
            dimension_semantics=("parallel", "parallel", "arbitrary"),
            vmem_limit_bytes=vmem_limit,
        ),
        cost_estimate=pl.CostEstimate(
            flops=flops, transcendentals=0, bytes_accessed=bytes_accessed),
    )(x2_p, w_p, b_p, d_p, u_p)

    return out[:M, :D_out].reshape(B, S, D_out)


if __name__ == "__main__":
    # Small shapes consistent with the module: seq=8, hidden=32, r=8.
    B, S, D_in, D_out, r = 2, 8, 32, 32, 8
    multiplier, alpha = 1.0, 1
    scale = multiplier * alpha / r

    key = jax.random.PRNGKey(0)
    k_x, k_w, k_b, k_down, k_up = jax.random.split(key, 5)

    x = jax.random.normal(k_x, (B, S, D_in), dtype=jnp.float32)

    # Base linear parameters (deterministic synthetic init).
    w = jax.random.normal(k_w, (D_out, D_in), dtype=jnp.float32) * 0.05
    b = jax.random.normal(k_b, (D_out,), dtype=jnp.float32) * 0.05

    # LoRA down per initialize_layers(): kaiming_uniform(a=sqrt(5)).
    fan_in = D_in
    gain = math.sqrt(2.0 / (1.0 + 5.0))
    bound = gain * math.sqrt(3.0 / fan_in)
    down_w = jax.random.uniform(
        k_down, (r, D_in), jnp.float32, minval=-bound, maxval=bound)
    # initialize_layers() zeros `up`; use a nonzero up here so the LoRA path is
    # actually exercised by the numerical check.
    up_w = jax.random.normal(k_up, (D_out, r), dtype=jnp.float32) * 0.05

    out = lora_linear_forward(x, w, b, down_w, up_w, scale)
    out = jax.block_until_ready(out)

    # Reference check in plain JAX.
    y_ref = x @ w.T + b
    h_ref = (x @ down_w.T) @ up_w.T
    ref = y_ref + scale * h_ref
    assert out.shape == (B, S, D_out)
    assert jnp.allclose(out, ref, atol=1e-5, rtol=1e-5), float(
        jnp.max(jnp.abs(out - ref)))

    print("KERNEL_OK")
</pallas_src>

<mosaic_0001>
module attributes {stable_mosaic.version = 11 : i64} {
  func.func @_lora_linear_kernel(%arg0: i32, %arg1: i32, %arg2: i32, %arg3: memref<16x128xf32, #tpu.memory_space<vmem>>, %arg4: memref<128x128xf32, #tpu.memory_space<vmem>>, %arg5: memref<1x128xf32, #tpu.memory_space<vmem>>, %arg6: memref<16x128xf32, #tpu.memory_space<vmem>>, %arg7: memref<128x128xf32, #tpu.memory_space<vmem>>, %arg8: memref<16x128xf32, #tpu.memory_space<vmem>>, %arg9: memref<16x128xf32, #tpu.memory_space<vmem>>) attributes {dimension_semantics = [#tpu.dimension_semantics<parallel>, #tpu.dimension_semantics<parallel>, #tpu.dimension_semantics<arbitrary>], iteration_bounds = array<i64: 1, 1, 1>, scalar_prefetch = 0 : i64, scratch_operands = 1 : i64, tpu.core_type = #tpu.core_type<tc>, window_params = [{transform_indices = @transform_0, window_bounds = array<i64: 16, 128>}, {transform_indices = @transform_1, window_bounds = array<i64: 128, 128>}, {transform_indices = @transform_2, window_bounds = array<i64: 1, 128>}, {transform_indices = @transform_3, window_bounds = array<i64: 16, 128>}, {transform_indices = @transform_4, window_bounds = array<i64: 128, 128>}, {transform_indices = @transform_5, window_bounds = array<i64: 16, 128>}]} {
    %c0_i32 = arith.constant 0 : i32
    %0 = arith.cmpi eq, %arg2, %c0_i32 : i32
    %1 = arith.extui %0 : i1 to i32
    %c0_i32_0 = arith.constant 0 : i32
    %2 = arith.cmpi ne, %1, %c0_i32_0 : i32
    scf.if %2 {
      %cst_10 = arith.constant 0.000000e+00 : f32
      %12 = vector.broadcast %cst_10 : f32 to vector<16x128xf32>
      %c0_11 = arith.constant 0 : index
      %c0_12 = arith.constant 0 : index
      %13 = vector.load %arg9[%c0_11, %c0_12] : memref<16x128xf32, #tpu.memory_space<vmem>>, vector<16x128xf32>
      tpu.vector_store %arg9[%c0_11, %c0_12], %12 {strides = array<i32>} : memref<16x128xf32, #tpu.memory_space<vmem>>, vector<16x128xf32>,
    } else {
    }
    %c0 = arith.constant 0 : index
    %c0_1 = arith.constant 0 : index
    %3 = vector.load %arg9[%c0, %c0_1] : memref<16x128xf32, #tpu.memory_space<vmem>>, vector<16x128xf32>
    %c0_2 = arith.constant 0 : index
    %c0_3 = arith.constant 0 : index
    %4 = vector.load %arg3[%c0_2, %c0_3] : memref<16x128xf32, #tpu.memory_space<vmem>>, vector<16x128xf32>
    %c0_4 = arith.constant 0 : index
    %c0_5 = arith.constant 0 : index
    %5 = vector.load %arg4[%c0_4, %c0_5] : memref<128x128xf32, #tpu.memory_space<vmem>>, vector<128x128xf32>
    %cst = arith.constant dense<0.000000e+00> : vector<16x128xf32>
    %6 = tpu.matmul %4, %5, %cst {dimension_numbers = #tpu.dot_dimension_numbers<[1], [1], [0], [0], [0, 0, 1, 0], [], []>} : vector<16x128xf32>, vector<128x128xf32>, vector<16x128xf32> -> vector<16x128xf32>
    %7 = arith.addf %3, %6 : vector<16x128xf32>
    %c0_6 = arith.constant 0 : index
    %c0_7 = arith.constant 0 : index
    %8 = vector.load %arg9[%c0_6, %c0_7] : memref<16x128xf32, #tpu.memory_space<vmem>>, vector<16x128xf32>
    tpu.vector_store %arg9[%c0_6, %c0_7], %7 {strides = array<i32>} : memref<16x128xf32, #tpu.memory_space<vmem>>, vector<16x128xf32>,
    %c0_i32_8 = arith.constant 0 : i32
    %9 = arith.cmpi eq, %arg2, %c0_i32_8 : i32
    %10 = arith.extui %9 : i1 to i32
    %c0_i32_9 = arith.constant 0 : i32
    %11 = arith.cmpi ne, %10, %c0_i32_9 : i32
    scf.if %11 {
      %c0_10 = arith.constant 0 : index
      %c0_11 = arith.constant 0 : index
      %12 = vector.load %arg6[%c0_10, %c0_11] : memref<16x128xf32, #tpu.memory_space<vmem>>, vector<16x128xf32>
      %c0_12 = arith.constant 0 : index
      %c0_13 = arith.constant 0 : index
      %13 = vector.load %arg7[%c0_12, %c0_13] : memref<128x128xf32, #tpu.memory_space<vmem>>, vector<128x128xf32>
      %cst_14 = arith.constant dense<0.000000e+00> : vector<16x128xf32>
      %14 = tpu.matmul %12, %13, %cst_14 {dimension_numbers = #tpu.dot_dimension_numbers<[1], [1], [0], [0], [0, 0, 1, 0], [], []>} : vector<16x128xf32>, vector<128x128xf32>, vector<16x128xf32> -> vector<16x128xf32>
      %c0_15 = arith.constant 0 : index
      %c0_16 = arith.constant 0 : index
      %15 = vector.load %arg9[%c0_15, %c0_16] : memref<16x128xf32, #tpu.memory_space<vmem>>, vector<16x128xf32>
      %c0_17 = arith.constant 0 : index
      %c0_18 = arith.constant 0 : index
      %16 = vector.load %arg5[%c0_17, %c0_18] : memref<1x128xf32, #tpu.memory_space<vmem>>, vector<1x128xf32>
      %17 = vector.broadcast %16 : vector<1x128xf32> to vector<16x128xf32>
      %18 = arith.addf %15, %17 : vector<16x128xf32>
      %19 = arith.addf %18, %14 : vector<16x128xf32>
      %c0_19 = arith.constant 0 : index
      %c0_20 = arith.constant 0 : index
      %20 = vector.load %arg8[%c0_19, %c0_20] : memref<16x128xf32, #tpu.memory_space<vmem>>, vector<16x128xf32>
      tpu.vector_store %arg8[%c0_19, %c0_20], %19 {strides = array<i32>} : memref<16x128xf32, #tpu.memory_space<vmem>>, vector<16x128xf32>,
    } else {
    }
    return
  }
  func.func @transform_0(%arg0: i32, %arg1: i32, %arg2: i32) -> (i32, i32) {
    %c0_i32 = arith.constant 0 : i32
    return %arg0, %arg2 : i32, i32
  }
  func.func @transform_1(%arg0: i32, %arg1: i32, %arg2: i32) -> (i32, i32) {
    %c0_i32 = arith.constant 0 : i32
    return %arg1, %arg2 : i32, i32
  }
  func.func @transform_2(%arg0: i32, %arg1: i32, %arg2: i32) -> (i32, i32) {
    %c0_i32 = arith.constant 0 : i32
    %c0_i32_0 = arith.constant 0 : i32
    return %c0_i32, %arg1 : i32, i32
  }
  func.func @transform_3(%arg0: i32, %arg1: i32, %arg2: i32) -> (i32, i32) {
    %c0_i32 = arith.constant 0 : i32
    %c0_i32_0 = arith.constant 0 : i32
    return %arg0, %c0_i32 : i32, i32
  }
  func.func @transform_4(%arg0: i32, %arg1: i32, %arg2: i32) -> (i32, i32) {
    %c0_i32 = arith.constant 0 : i32
    %c0_i32_0 = arith.constant 0 : i32
    return %arg1, %c0_i32 : i32, i32
  }
  func.func @transform_5(%arg0: i32, %arg1: i32, %arg2: i32) -> (i32, i32) {
    %c0_i32 = arith.constant 0 : i32
    return %arg0, %arg1 : i32, i32
  }
}

</mosaic_0001>

<llo_original>
// kernel: tpu_custom_call.1
$region0: #{tpu_custom_call.1}
  #allocation0 [shape = 'u32[]', space=smem, size = 0x4, offset = 0x4, fixed_abs, tag = 'smem constant byte address 0x4 - core index']
  #allocation1 [shape = 'u32[72,128]{1,0:T(1,128)}', space=vmem, size = 0x9000, scoped, tag = 'internal scratch']
  #allocation2 [shape = 'f32[16,128]{1,0:T(8,128)}', space=vmem, size = 0x2000, scoped, tag = 'scratch operand']
  %s0 = inlined_call_operand.hbm [shape: f32[16,128], index: 0, kind: input, shape index: {}]
  %s1 = inlined_call_operand.hbm [shape: f32[128,128], index: 1, kind: input, shape index: {}]
  %s2 = inlined_call_operand.vmem [shape: f32[1,128], index: 2, kind: input, shape index: {}]
  %s3 = inlined_call_operand.hbm [shape: f32[16,128], index: 3, kind: input, shape index: {}]
  %s4 = inlined_call_operand.hbm [shape: f32[128,128], index: 4, kind: input, shape index: {}]
  %s5 = inlined_call_operand.hbm [shape: f32[16,128], index: 5, kind: output, shape index: {}]
  %s6 = sld [smem:[#allocation0]]
  $region54: #{tpu_custom_call.1} parent=0
    _
  %s8 = ssub.s32 1, %s6
  %s9 = scalar_select 0, %s8, %s6
  $region1: #{tpu_custom_call.1} parent=0
    #allocation3 [shape = 'u8[8192]{0}', space=vmem, size = 0x2000, scoped, tag = 'input window, operand 0, single buffered']
    #allocation4 [shape = 's32[1]{0}', space=sflag, size = 0x4, scoped, tag = 'scoped memory for tpu_custom_call.1']
    #allocation5 [shape = 's32[1]{0}', space=sflag, size = 0x4, scoped, tag = 'scoped memory for tpu_custom_call.1']
    #allocation6 [shape = 'u8[65536]{0}', space=vmem, size = 0x10000, scoped, tag = 'input window, operand 1, single buffered']
    #allocation7 [shape = 's32[1]{0}', space=sflag, size = 0x4, scoped, tag = 'scoped memory for tpu_custom_call.1']
    #allocation8 [shape = 'u8[8192]{0}', space=vmem, size = 0x2000, scoped, tag = 'input window, operand 3, single buffered']
    #allocation9 [shape = 'u8[65536]{0}', space=vmem, size = 0x10000, scoped, tag = 'input window, operand 4, single buffered']
    #allocation10 [shape = 's32[1]{0}', space=sflag, size = 0x4, scoped, tag = 'scoped memory for tpu_custom_call.1']
    #allocation11 [shape = 'u8[8192]{0}', space=vmem, size = 0x2000, scoped, tag = 'output window, operand 0, single buffered']
    %10 = vsyncpa [#allocation4], 0
    %11 = vsyncpa [#allocation7], 0
    %12 = vsyncpa [#allocation10], 0
    %13 = vsyncpa [#allocation5], 0
    // Predicated region
    $region2: #{tpu_custom_call.1} parent=1 // pred_check
      _
    $region3: #{tpu_custom_call.1} parent=1 // pred_check_branch
      %15 = sbr.rel (0) target = $region5
    $region4: #{tpu_custom_call.1} parent=1 // pred_region
      %17 = vsyncadd [#allocation4], 0
      %s18 = sshll.u32 %s0, 4
      %s19 = int_to_ptr.hbm [resolvable:$true] %s18
      %s20 = sshll.u32 [#allocation3], 4
      %s21 = int_to_ptr.vmem [resolvable:$true] %s20
      %26 = dma.hbm_to_vmem [thread:$0]  %s19, 256, %s21, [#allocation4], 128, 128, 8
    $region5: #{tpu_custom_call.1} parent=1 // pred_fallthru
      _
    // Predicated region
    $region6: #{tpu_custom_call.1} parent=1 // pred_check
      _
    $region7: #{tpu_custom_call.1} parent=1 // pred_check_branch
      %28 = sbr.rel (0) target = $region9
    $region8: #{tpu_custom_call.1} parent=1 // pred_region
      %30 = vsyncadd [#allocation7], 0
      %s31 = sshll.u32 %s1, 4
      %s32 = int_to_ptr.hbm [resolvable:$true] %s31
      %s33 = sshll.u32 [#allocation6], 4
      %s34 = int_to_ptr.vmem [resolvable:$true] %s33
      %39 = dma.hbm_to_vmem [thread:$0]  %s32, 2048, %s34, [#allocation7], 128, 128, 8
    $region9: #{tpu_custom_call.1} parent=1 // pred_fallthru
      _
    // Predicated region
    $region10: #{tpu_custom_call.1} parent=1 // pred_check
      _
    $region11: #{tpu_custom_call.1} parent=1 // pred_check_branch
      %41 = sbr.rel (0) target = $region13
    $region12: #{tpu_custom_call.1} parent=1 // pred_region
      _
    $region13: #{tpu_custom_call.1} parent=1 // pred_fallthru
      _
    // Predicated region
    $region14: #{tpu_custom_call.1} parent=1 // pred_check
      _
    $region15: #{tpu_custom_call.1} parent=1 // pred_check_branch
      %43 = sbr.rel (0) target = $region17
    $region16: #{tpu_custom_call.1} parent=1 // pred_region
      %45 = vsyncadd [#allocation7], 0
      %s46 = sshll.u32 %s3, 4
      %s47 = int_to_ptr.hbm [resolvable:$true] %s46
      %s48 = sshll.u32 [#allocation8], 4
      %s49 = int_to_ptr.vmem [resolvable:$true] %s48
      %54 = dma.hbm_to_vmem [thread:$0]  %s47, 256, %s49, [#allocation7], 128, 128, 8
    $region17: #{tpu_custom_call.1} parent=1 // pred_fallthru
      _
    // Predicated region
    $region18: #{tpu_custom_call.1} parent=1 // pred_check
      _
    $region19: #{tpu_custom_call.1} parent=1 // pred_check_branch
      %56 = sbr.rel (0) target = $region21
    $region20: #{tpu_custom_call.1} parent=1 // pred_region
      %58 = vsyncadd [#allocation10], 0
      %s59 = sshll.u32 %s4, 4
      %s60 = int_to_ptr.hbm [resolvable:$true] %s59
      %s61 = sshll.u32 [#allocation9], 4
      %s62 = int_to_ptr.vmem [resolvable:$true] %s61
      %67 = dma.hbm_to_vmem [thread:$0]  %s60, 2048, %s62, [#allocation10], 128, 128, 8
    $region21: #{tpu_custom_call.1} parent=1 // pred_fallthru
      _
    // Predicated region
    $region22: #{tpu_custom_call.1} parent=1 // pred_check
      _
    $region23: #{tpu_custom_call.1} parent=1 // pred_check_branch
      %69 = sbr.rel (0) target = $region25
    $region24: #{tpu_custom_call.1} parent=1 // pred_region
      %71 = dma.done [#allocation4], 256
    $region25: #{tpu_custom_call.1} parent=1 // pred_fallthru
      _
    // Predicated region
    $region26: #{tpu_custom_call.1} parent=1 // pred_check
      _
    $region27: #{tpu_custom_call.1} parent=1 // pred_check_branch
      %73 = sbr.rel (0) target = $region29
    $region28: #{tpu_custom_call.1} parent=1 // pred_region
      %75 = dma.done [#allocation7], 2048
    $region29: #{tpu_custom_call.1} parent=1 // pred_fallthru
      _
    // Predicated region
    $region30: #{tpu_custom_call.1} parent=1 // pred_check
      _
    $region31: #{tpu_custom_call.1} parent=1 // pred_check_branch
      %77 = sbr.rel (0) target = $region33
    $region32: #{tpu_custom_call.1} parent=1 // pred_region
      %79 = dma.done [#allocation7], 256
    $region33: #{tpu_custom_call.1} parent=1 // pred_fallthru
      _
    // Predicated region
    $region34: #{tpu_custom_call.1} parent=1 // pred_check
      _
    $region35: #{tpu_custom_call.1} parent=1 // pred_check_branch
      %81 = sbr.rel (0) target = $region37
    $region36: #{tpu_custom_call.1} parent=1 // pred_region
      %83 = dma.done [#allocation10], 2048
    $region37: #{tpu_custom_call.1} parent=1 // pred_fallthru
      _
    %p84 = scmp.eq.s32.totalorder 0, 0
    // Predicated region
    $region38: #{tpu_custom_call.1} parent=1 // pred_check
      %p85 = pneg %p84
    $region39: #{tpu_custom_call.1} parent=1 // pred_check_branch
      %87 = sbr.rel (%p85) target = $region41
    $region40: #{tpu_custom_call.1} parent=1 // pred_region
      %88 = vst [vmem:[#allocation2] sm:$0xff] 0.0
      %89 = vst [vmem:[#allocation2 + $0x8] sm:$0xff] 0.0
    $region41: #{tpu_custom_call.1} parent=1 // pred_fallthru
      _
    %v90 = vld [vmem:[#allocation2] sm:$0xff]
    %v91 = vld [vmem:[#allocation2 + $0x8] sm:$0xff]
    %v92 = vld [vmem:[#allocation3] sm:$0xff]
    %v93 = vld [vmem:[#allocation3 + $0x8] sm:$0xff]
    %v94 = vld [vmem:[#allocation6] sm:$0xff]
    %v95 = vld [vmem:[#allocation6 + $0x8] sm:$0xff]
    %v96 = vld [vmem:[#allocation6 + $0x10] sm:$0xff]
    %v97 = vld [vmem:[#allocation6 + $0x18] sm:$0xff]
    %v98 = vld [vmem:[#allocation6 + $0x20] sm:$0xff]
    %v99 = vld [vmem:[#allocation6 + $0x28] sm:$0xff]
    %v100 = vld [vmem:[#allocation6 + $0x30] sm:$0xff]
    %v101 = vld [vmem:[#allocation6 + $0x38] sm:$0xff]
    %v102 = vld [vmem:[#allocation6 + $0x40] sm:$0xff]
    %v103 = vld [vmem:[#allocation6 + $0x48] sm:$0xff]
    %v104 = vld [vmem:[#allocation6 + $0x50] sm:$0xff]
    %v105 = vld [vmem:[#allocation6 + $0x58] sm:$0xff]
    %v106 = vld [vmem:[#allocation6 + $0x60] sm:$0xff]
    %v107 = vld [vmem:[#allocation6 + $0x68] sm:$0xff]
    %v108 = vld [vmem:[#allocation6 + $0x70] sm:$0xff]
    %v109 = vld [vmem:[#allocation6 + $0x78] sm:$0xff]
    %110 = vmatpush.xpose.msra.mxu0 %v109
    %111 = vmatpush.xpose.msra.mxu0 %v108
    %112 = vmatpush.xpose.msra.mxu0 %v107
    %113 = vmatpush.xpose.msra.mxu0 %v106
    %114 = vmatpush.xpose.msra.mxu0 %v105
    %115 = vmatpush.xpose.msra.mxu0 %v104
    %116 = vmatpush.xpose.msra.mxu0 %v103
    %117 = vmatpush.xpose.msra.mxu0 %v102
    %118 = vmatpush.xpose.msra.mxu0 %v101
    %119 = vmatpush.xpose.msra.mxu0 %v100
    %120 = vmatpush.xpose.msra.mxu0 %v99
    %121 = vmatpush.xpose.msra.mxu0 %v98
    %122 = vmatpush.xpose.msra.mxu0 %v97
    %123 = vmatpush.xpose.msra.mxu0 %v96
    %124 = vmatpush.xpose.msra.mxu0 %v95
    %125 = vmatpush.xpose.msra.mxu0 %v94
    %126 = vmatmul.f32.gmra.mxu0 %v92
    %v127 = vpop.f32.mrf.mxu0
    %v128 = vadd.f32 0.0, %v127
    %129 = vmatmul.f32.gmra.mxu0 %v93
    %v130 = vpop.f32.mrf.mxu0
    %v131 = vadd.f32 0.0, %v130
    %132 = vdwg.mxu0
    %v133 = vadd.f32 %v90, %v128
    %v134 = vadd.f32 %v91, %v131
    %135 = vst [vmem:[#allocation2] sm:$0xff] %v133
    %136 = vst [vmem:[#allocation2 + $0x8] sm:$0xff] %v134
    // Predicated region
    $region42: #{tpu_custom_call.1} parent=1 // pred_check
      %p137 = pneg %p84
    $region43: #{tpu_custom_call.1} parent=1 // pred_check_branch
      %139 = sbr.rel (%p137) target = $region45
    $region44: #{tpu_custom_call.1} parent=1 // pred_region
      %v140 = vld [vmem:[#allocation8] sm:$0xff]
      %v141 = vld [vmem:[#allocation8 + $0x8] sm:$0xff]
      %v142 = vld [vmem:[#allocation9] sm:$0xff]
      %v143 = vld [vmem:[#allocation9 + $0x8] sm:$0xff]
      %v144 = vld [vmem:[#allocation9 + $0x10] sm:$0xff]
      %v145 = vld [vmem:[#allocation9 + $0x18] sm:$0xff]
      %v146 = vld [vmem:[#allocation9 + $0x20] sm:$0xff]
      %v147 = vld [vmem:[#allocation9 + $0x28] sm:$0xff]
      %v148 = vld [vmem:[#allocation9 + $0x30] sm:$0xff]
      %v149 = vld [vmem:[#allocation9 + $0x38] sm:$0xff]
      %v150 = vld [vmem:[#allocation9 + $0x40] sm:$0xff]
      %v151 = vld [vmem:[#allocation9 + $0x48] sm:$0xff]
      %v152 = vld [vmem:[#allocation9 + $0x50] sm:$0xff]
      %v153 = vld [vmem:[#allocation9 + $0x58] sm:$0xff]
      %v154 = vld [vmem:[#allocation9 + $0x60] sm:$0xff]
      %v155 = vld [vmem:[#allocation9 + $0x68] sm:$0xff]
      %v156 = vld [vmem:[#allocation9 + $0x70] sm:$0xff]
      %v157 = vld [vmem:[#allocation9 + $0x78] sm:$0xff]
      %158 = vmatpush.xpose.msra.mxu0 %v157
      %159 = vmatpush.xpose.msra.mxu0 %v156
      %160 = vmatpush.xpose.msra.mxu0 %v155
      %161 = vmatpush.xpose.msra.mxu0 %v154
      %162 = vmatpush.xpose.msra.mxu0 %v153
      %163 = vmatpush.xpose.msra.mxu0 %v152
      %164 = vmatpush.xpose.msra.mxu0 %v151
      %165 = vmatpush.xpose.msra.mxu0 %v150
      %166 = vmatpush.xpose.msra.mxu0 %v149
      %167 = vmatpush.xpose.msra.mxu0 %v148
      %168 = vmatpush.xpose.msra.mxu0 %v147
      %169 = vmatpush.xpose.msra.mxu0 %v146
      %170 = vmatpush.xpose.msra.mxu0 %v145
      %171 = vmatpush.xpose.msra.mxu0 %v144
      %172 = vmatpush.xpose.msra.mxu0 %v143
      %173 = vmatpush.xpose.msra.mxu0 %v142
      %174 = vmatmul.f32.gmra.mxu0 %v140
      %v175 = vpop.f32.mrf.mxu0
      %v176 = vadd.f32 0.0, %v175
      %177 = vmatmul.f32.gmra.mxu0 %v141
      %v178 = vpop.f32.mrf.mxu0
      %v179 = vadd.f32 0.0, %v178
      %180 = vdwg.mxu0
      %v181 = vld [vmem:[#allocation2] sm:$0xff]
      %v182 = vld [vmem:[#allocation2 + $0x8] sm:$0xff]
      %v183 = vld [vmem:[%s2] sm:$0x1]
      %v185 = vperm.slane %v183, 0
      %v187 = vadd.f32 %v181, %v185
      %v188 = vadd.f32 %v182, %v185
      %v189 = vadd.f32 %v187, %v176
      %v190 = vadd.f32 %v188, %v179
      %191 = vst [vmem:[#allocation11] sm:$0xff] %v189
      %192 = vst [vmem:[#allocation11 + $0x8] sm:$0xff] %v190
    $region45: #{tpu_custom_call.1} parent=1 // pred_fallthru
      _
    // Predicated region
    $region46: #{tpu_custom_call.1} parent=1 // pred_check
      _
    $region47: #{tpu_custom_call.1} parent=1 // pred_check_branch
      %194 = sbr.rel (0) target = $region49
    $region48: #{tpu_custom_call.1} parent=1 // pred_region
      %196 = vsyncadd [#allocation5], 0
      %s197 = sshll.u32 [#allocation11], 4
      %s198 = int_to_ptr.vmem [resolvable:$true] %s197
      %s199 = sshll.u32 %s5, 4
      %s200 = int_to_ptr.hbm [resolvable:$true] %s199
      %205 = dma.vmem_to_hbm [thread:$0]  %s198, 256, %s200, [#allocation5], 128, 128, 8
    $region49: #{tpu_custom_call.1} parent=1 // pred_fallthru
      _
    // Predicated region
    $region50: #{tpu_custom_call.1} parent=1 // pred_check
      _
    $region51: #{tpu_custom_call.1} parent=1 // pred_check_branch
      %207 = sbr.rel (0) target = $region53
    $region52: #{tpu_custom_call.1} parent=1 // pred_region
      %209 = dma.done [#allocation5], 256
    $region53: #{tpu_custom_call.1} parent=1 // pred_fallthru
      _
    %210 = vsyncpa [#allocation4], 1
    %211 = vsyncpa [#allocation7], 1
    %212 = vsyncpa [#allocation10], 1
    %213 = vsyncpa [#allocation5], 1

</llo_original>
